<compile_context>
chip_gen: v6e
topology: v6e:2x2x1
jax: 0.10.0
libtpu: 0.0.40
codegen_flags: <defaults>
</compile_context>

<pallas_src>
import jax
import jax.numpy as jnp
from jax.experimental import pallas as pl
from jax.experimental.pallas import tpu as pltpu


_LANE = 128
_TARGET_BLOCK_BYTES = 4 * 1024 * 1024   # ~4 MiB per array per block
_VMEM_LIMIT_BYTES = 48 * 1024 * 1024    # safe on v5e/v6e (128 MiB) and v7x (64 MiB)
_MIN_PALLAS_ELEMS = 64 * 1024           # below this, fused XLA elementwise wins


def _cos_out_kernel(x_ref, o_ref):
    # Compute in f32 regardless of input dtype (accuracy; cast back on store).
    x = x_ref[...].astype(jnp.float32)
    o_ref[...] = (0.5 * (jnp.cos(x * x) + 1.0)).astype(o_ref.dtype)


def _cos_out_ref(x: jax.Array) -> jax.Array:
    """Plain-JAX path (tiny inputs / <=127-element tails). Same f32 math."""
    xf = x.astype(jnp.float32)
    return (0.5 * (jnp.cos(xf * xf) + 1.0)).astype(x.dtype)


def _round_up(v: int, m: int) -> int:
    return ((v + m - 1) // m) * m


def _round_down(v: int, m: int) -> int:
    return (v // m) * m


def _cos_out_pallas_2d(x2d: jax.Array) -> jax.Array:
    """Run the kernel over a lane-dense (rows, width) slab."""
    rows, width = x2d.shape
    itemsize = x2d.dtype.itemsize

    # Dtype-aware sublane packing: 8 rows for 4-byte, 16 for 2-byte, 32 for 1-byte.
    sub_mult = max(8, 32 // itemsize)

    # Row tile targeting ~4 MiB of bytes per block.
    block_elems = _TARGET_BLOCK_BYTES // itemsize
    tile_rows = max(sub_mult, _round_down(block_elems // width, sub_mult))
    if tile_rows >= rows:
        # A single block spanning the full row dim is always layout-legal.
        tile_rows = rows
    # Guarantee >= 2 grid steps when the slab can be split on a sublane-aligned
    # boundary, so v7x's two TensorCores both get work on medium inputs.
    if rows > sub_mult and pl.cdiv(rows, tile_rows) < 2:
        tile_rows = max(sub_mult, _round_up(pl.cdiv(rows, 2), sub_mult))

    grid = (pl.cdiv(rows, tile_rows),)  # ragged last block is masked by Pallas

    n = rows * width
    cost = pl.CostEstimate(
        flops=3 * n,                      # square, add, scale
        transcendentals=n,                # one cos per element
        bytes_accessed=2 * n * itemsize,  # read + write
    )

    return pl.pallas_call(
        _cos_out_kernel,
        out_shape=jax.ShapeDtypeStruct((rows, width), x2d.dtype),
        grid=grid,
        in_specs=[pl.BlockSpec((tile_rows, width), lambda i: (i, 0))],
        out_specs=pl.BlockSpec((tile_rows, width), lambda i: (i, 0)),
        compiler_params=pltpu.CompilerParams(
            dimension_semantics=("parallel",),
            vmem_limit_bytes=_VMEM_LIMIT_BYTES,
        ),
        cost_estimate=cost,
    )(x2d)


def cos_out(x: jax.Array, *, min_pallas_elems: int = _MIN_PALLAS_ELEMS) -> jax.Array:
    """Applies y = 0.5*(cos(x**2)+1) elementwise (Pallas TPU kernel for large x)."""
    orig_shape = x.shape
    n = x.size
    if n == 0 or n < min_pallas_elems:
        return _cos_out_ref(x)

    x_flat = jnp.ravel(x)

    # 128-aligned prefix goes through the kernel; the (rare) <=127-element tail
    # is computed in plain jnp — avoids the pad + slice O(n) HBM copies.
    n_main = (n // _LANE) * _LANE
    n_tail = n - n_main
    if n_main == 0:
        return _cos_out_ref(x)

    # Widest lane-dense slab width that divides the aligned prefix exactly, so
    # the wrapper-side reshape is a free view of a contiguous buffer.
    width = _LANE
    for cand in (4096, 2048, 1024, 512, 256):
        if n_main % cand == 0:
            width = cand
            break
    rows = n_main // width

    if n_tail == 0:
        x_main = x_flat
    else:
        x_main = jax.lax.slice(x_flat, (0,), (n_main,))

    out_main = _cos_out_pallas_2d(x_main.reshape(rows, width)).reshape(-1)

    if n_tail == 0:
        out_flat = out_main
    else:
        tail_out = _cos_out_ref(jax.lax.slice(x_flat, (n_main,), (n,)))
        out_flat = jnp.concatenate([out_main, tail_out])

    return out_flat.reshape(orig_shape)


if __name__ == "__main__":
    key = jax.random.PRNGKey(0)
    # Small NCHW-shaped input consistent with typical module usage.
    x = jax.random.normal(key, (2, 4, 16, 16), dtype=jnp.float32)
    y_ref = 0.5 * (jnp.cos(x ** 2) + 1.0)

    # 1) Force the Pallas path on the small test input (the default heuristic
    #    would route a shape this tiny to the fused-XLA fast path).
    y = cos_out(x, min_pallas_elems=0)
    jax.block_until_ready(y)
    assert y.shape == x.shape and y.dtype == x.dtype
    assert jnp.allclose(y, y_ref, atol=1e-6, rtol=1e-6)

    # 2) Default heuristic (tiny input -> plain fused elementwise).
    y2 = cos_out(x)
    jax.block_until_ready(y2)
    assert jnp.allclose(y2, y_ref, atol=1e-6, rtol=1e-6)

    # 3) Ragged, non-128-multiple size in bf16: exercises the aligned-prefix
    #    kernel + jnp-tail path and dtype-aware tiling.
    x3 = jax.random.normal(jax.random.PRNGKey(1), (3, 5, 77), dtype=jnp.bfloat16)
    y3 = cos_out(x3, min_pallas_elems=0)
    jax.block_until_ready(y3)
    y3_ref = _cos_out_ref(x3)
    assert y3.shape == x3.shape and y3.dtype == x3.dtype
    assert jnp.allclose(y3.astype(jnp.float32), y3_ref.astype(jnp.float32),
                        atol=1e-2, rtol=1e-2)

    print("KERNEL_OK")
</pallas_src>

<mosaic_0001>
module attributes {stable_mosaic.version = 11 : i64} {
  func.func @_cos_out_kernel(%arg0: i32, %arg1: memref<1x2048xf32, #tpu.memory_space<vmem>>, %arg2: memref<1x2048xf32, #tpu.memory_space<vmem>>) attributes {dimension_semantics = [#tpu.dimension_semantics<parallel>], iteration_bounds = array<i64: 1>, scalar_prefetch = 0 : i64, scratch_operands = 0 : i64, tpu.core_type = #tpu.core_type<tc>, window_params = [{transform_indices = @transform_0, window_bounds = array<i64: 1, 2048>}, {transform_indices = @transform_1, window_bounds = array<i64: 1, 2048>}]} {
    %c0 = arith.constant 0 : index
    %c0_0 = arith.constant 0 : index
    %0 = vector.load %arg1[%c0, %c0_0] : memref<1x2048xf32, #tpu.memory_space<vmem>>, vector<1x2048xf32>
    %1 = arith.mulf %0, %0 : vector<1x2048xf32>
    %2 = math.cos %1 : vector<1x2048xf32>
    %cst = arith.constant 1.000000e+00 : f32
    %3 = vector.broadcast %cst : f32 to vector<1x2048xf32>
    %4 = arith.addf %2, %3 : vector<1x2048xf32>
    %cst_1 = arith.constant 5.000000e-01 : f32
    %5 = vector.broadcast %cst_1 : f32 to vector<1x2048xf32>
    %6 = arith.mulf %5, %4 : vector<1x2048xf32>
    %c0_2 = arith.constant 0 : index
    %c0_3 = arith.constant 0 : index
    %7 = vector.load %arg2[%c0_2, %c0_3] : memref<1x2048xf32, #tpu.memory_space<vmem>>, vector<1x2048xf32>
    tpu.vector_store %arg2[%c0_2, %c0_3], %6 {strides = array<i32>} : memref<1x2048xf32, #tpu.memory_space<vmem>>, vector<1x2048xf32>,
    return
  }
  func.func @transform_0(%arg0: i32) -> (i32, i32) {
    %c0_i32 = arith.constant 0 : i32
    %c0_i32_0 = arith.constant 0 : i32
    return %arg0, %c0_i32 : i32, i32
  }
  func.func @transform_1(%arg0: i32) -> (i32, i32) {
    %c0_i32 = arith.constant 0 : i32
    %c0_i32_0 = arith.constant 0 : i32
    return %arg0, %c0_i32 : i32, i32
  }
}

</mosaic_0001>

<llo_original>
// kernel: tpu_custom_call.1
$region0: #{tpu_custom_call.1}
  #allocation0 [shape = 'u32[]', space=smem, size = 0x4, offset = 0x4, fixed_abs, tag = 'smem constant byte address 0x4 - core index']
  #allocation1 [shape = 'u32[144,128]{1,0:T(1,128)}', space=vmem, size = 0x12000, scoped, tag = 'internal scratch']
  %s0 = inlined_call_operand.hbm [shape: f32[1,2048], index: 0, kind: input, shape index: {}]
  %s1 = inlined_call_operand.hbm [shape: f32[1,2048], index: 1, kind: output, shape index: {}]
  %s2 = sld [smem:[#allocation0]]
  $region18: #{tpu_custom_call.1} parent=0
    _
  %s4 = ssub.s32 1, %s2
  %s5 = scalar_select 0, %s4, %s2
  $region1: #{tpu_custom_call.1} parent=0
    #allocation2 [shape = 'u8[8192]{0}', space=vmem, size = 0x2000, scoped, tag = 'input window, operand 0, single buffered']
    #allocation3 [shape = 's32[1]{0}', space=sflag, size = 0x4, scoped, tag = 'scoped memory for tpu_custom_call.1']
    #allocation4 [shape = 's32[1]{0}', space=sflag, size = 0x4, scoped, tag = 'scoped memory for tpu_custom_call.1']
    #allocation5 [shape = 'u8[8192]{0}', space=vmem, size = 0x2000, scoped, tag = 'output window, operand 0, single buffered']
    %6 = vsyncpa [#allocation3], 0
    %7 = vsyncpa [#allocation4], 0
    // Predicated region
    $region2: #{tpu_custom_call.1} parent=1 // pred_check
      _
    $region3: #{tpu_custom_call.1} parent=1 // pred_check_branch
      %9 = sbr.rel (0) target = $region5
    $region4: #{tpu_custom_call.1} parent=1 // pred_region
      %s11 = ssub.s32 256, 256
      %12 = vsyncadd [#allocation3], %s11
      %s14 = sshll.u32 [#allocation2], 4
      %s15 = int_to_ptr.vmem [resolvable:$true] %s14
      %17 = dma.hbm_to_vmem [thread:$0]  %s0, 256, %s15, [#allocation3]
    $region5: #{tpu_custom_call.1} parent=1 // pred_fallthru
      _
    // Predicated region
    $region6: #{tpu_custom_call.1} parent=1 // pred_check
      _
    $region7: #{tpu_custom_call.1} parent=1 // pred_check_branch
      %19 = sbr.rel (0) target = $region9
    $region8: #{tpu_custom_call.1} parent=1 // pred_region
      %20 = dma.done [#allocation3], 256
    $region9: #{tpu_custom_call.1} parent=1 // pred_fallthru
      _
    %v21 = vld [vmem:[#allocation2] sm:$0xff]
    %v22 = vld [vmem:[#allocation2 + $0x8] sm:$0xff]
    %v23 = vmul.f32 %v21, %v21
    %v24 = vmul.f32 %v22, %v22
    %v25 = vand.u32 2147483647, %v23
    %vm26 = vcmp.le.f32.partialorder %v25, 0.7853982
    %vm27 = vcmp.lt.s32.totalorder %v23, 0
    %v28 = vand.u32 %v23, 2139095040
    %v29 = vshrl.u32 %v28, 23
    %v30 = vsub.s32 %v29, 127
    %v31 = vand.u32 2147483647, %v23
    %v32 = vand.u32 %v31, 8388607
    %v33 = vor.u32 %v32, 8388608
    %v34 = vsub.s32 0, %v33
    %v35 = vadd.s32 %v30, 1
    %vm36 = vcmp.gt.s32.totalorder %v35, 0
    %v37 = vsel %vm36, %v35, 0
    %v38 = vshrl.u32 %v37, 5
    %v39 = vand.u32 %v37, 31
    %v40 = vsub.s32 32, %v39
    %v41 = vshrl.u32 683565275, %v40
    %v42 = vshll.u32 683565275, %v39
    %v43 = vshrl.u32 2475754826, %v40
    %v44 = vor.u32 %v42, %v43
    %v45 = vshll.u32 2475754826, %v39
    %v46 = vshrl.u32 2131351028, %v40
    %v47 = vor.u32 %v45, %v46
    %v48 = vshll.u32 2131351028, %v39
    %v49 = vshrl.u32 2102212464, %v40
    %v50 = vor.u32 %v48, %v49
    %v51 = vshll.u32 2102212464, %v39
    %v52 = vshrl.u32 920167782, %v40
    %v53 = vor.u32 %v51, %v52
    %v54 = vshll.u32 920167782, %v39
    %v55 = vshrl.u32 1326507024, %v40
    %v56 = vor.u32 %v54, %v55
    %vm57 = vcmp.lt.s32.totalorder %v38, 1
    %vm58 = vcmp.lt.s32.totalorder %v38, 2
    %vm59 = vcmp.lt.s32.totalorder %v38, 3
    %vm60 = vcmp.lt.s32.totalorder %v38, 4
    %v61 = vsel %vm57, %v41, %v44
    %v62 = vsel %vm60, %v50, 2102212464
    %v63 = vsel %vm59, %v47, %v62
    %v64 = vsel %vm58, %v61, %v63
    %v65 = vsel %vm57, %v44, %v47
    %v66 = vsel %vm60, %v53, 920167782
    %v67 = vsel %vm59, %v50, %v66
    %v68 = vsel %vm58, %v65, %v67
    %v69 = vsel %vm57, %v47, %v50
    %v70 = vsel %vm60, %v56, 1326507024
    %v71 = vsel %vm59, %v53, %v70
    %v72 = vsel %vm58, %v69, %v71
    %v73 = vshll.u32 %v33, 8
    %v74 = vmul.u32.u64.compose %v73, %v72
    %v75 = vextract.low.u32 %v74
    %v76 = vextract.high.u32 %v74
    %v77 = vmul.u32.u64.compose %v73, %v68
    %v78 = vextract.low.u32 %v77
    %v79 = vextract.high.u32 %v77
    %v80 = vmul.u32 %v73, %v64
    %v81 = vadd.s32 %v76, %v78
    %vm82 = vc.u32 %v76, %v78
    %v83 = vadd.s32 %v79, 1
    %v84 = vsel %vm82, %v83, %v79
    %v85 = vadd.s32 %v80, %v84
    %v86 = vadd.s32 %v85, 536870912
    %v87 = vshrl.u32 %v86, 30
    %v88 = vshll.u32 %v87, 30
    %v89 = vsub.s32 %v85, %v88
    %vm90 = vcmp.lt.s32.totalorder %v89, 0
    %v91 = vsub.s32 0, %v89
    %v92 = vsel %vm90, %v91, %v89
    %v93 = vclz %v92
    %v94 = vsub.s32 %v93, 2
    %vm95 = vcmp.gt.s32.totalorder 0, %v94
    %v96 = vsel %vm95, 0, %v94
    %v97 = vsub.s32 32, %v96
    %v98 = vshll.u32 %v89, %v96
    %v99 = vshrl.u32 %v81, %v97
    %v100 = vor.u32 %v98, %v99
    %v101 = vsub.s32 4294967266, %v96
    %v102 = vadd.s32 %v101, 127
    %v103 = vshll.u32 %v102, 23
    %v104 = vor.u32 4788187, %v103
    %v105 = vand.u32 2147483647, %v104
    %v107 = vcvt.s32.f32 %v100
    %v108 = vmul.f32 %v107, %v105
    %v109 = vxor.u32 %v108, 2147483648
    %v110 = vsel %vm27, %v109, %v108
    %v111 = vsub.s32 4, %v87
    %v112 = vsel %vm27, %v111, %v87
    %v113 = vsel %vm26, %v23, %v110
    %v114 = vsel %vm26, 0, %v112
    %v115 = vcosq.f32.pop %v113
    %v116 = vsinq.f32.pop %v113
    %vm117 = vweird.f32 %v23
    %v118 = vand.u32 %v114, 3
    %vm119 = vcmp.lt.s32.totalorder %v118, 2
    %vm120 = vcmp.eq.s32.totalorder %v118, 0
    %v121 = vxor.u32 %v116, 2147483648
    %v122 = vsel %vm120, %v115, %v121
    %vm123 = vcmp.eq.s32.totalorder %v118, 2
    %v124 = vxor.u32 %v115, 2147483648
    %v125 = vsel %vm123, %v124, %v116
    %v126 = vsel %vm119, %v122, %v125
    %v127 = vsel %vm117, nan, %v126
    %v128 = vand.u32 2147483647, %v24
    %vm129 = vcmp.le.f32.partialorder %v128, 0.7853982
    %vm130 = vcmp.lt.s32.totalorder %v24, 0
    %v131 = vand.u32 %v24, 2139095040
    %v132 = vshrl.u32 %v131, 23
    %v133 = vsub.s32 %v132, 127
    %v134 = vand.u32 2147483647, %v24
    %v135 = vand.u32 %v134, 8388607
    %v136 = vor.u32 %v135, 8388608
    %v137 = vsub.s32 0, %v136
    %v138 = vadd.s32 %v133, 1
    %vm139 = vcmp.gt.s32.totalorder %v138, 0
    %v140 = vsel %vm139, %v138, 0
    %v141 = vshrl.u32 %v140, 5
    %v142 = vand.u32 %v140, 31
    %v143 = vsub.s32 32, %v142
    %v144 = vshrl.u32 683565275, %v143
    %v145 = vshll.u32 683565275, %v142
    %v146 = vshrl.u32 2475754826, %v143
    %v147 = vor.u32 %v145, %v146
    %v148 = vshll.u32 2475754826, %v142
    %v149 = vshrl.u32 2131351028, %v143
    %v150 = vor.u32 %v148, %v149
    %v151 = vshll.u32 2131351028, %v142
    %v152 = vshrl.u32 2102212464, %v143
    %v153 = vor.u32 %v151, %v152
    %v154 = vshll.u32 2102212464, %v142
    %v155 = vshrl.u32 920167782, %v143
    %v156 = vor.u32 %v154, %v155
    %v157 = vshll.u32 920167782, %v142
    %v158 = vshrl.u32 1326507024, %v143
    %v159 = vor.u32 %v157, %v158
    %vm160 = vcmp.lt.s32.totalorder %v141, 1
    %vm161 = vcmp.lt.s32.totalorder %v141, 2
    %vm162 = vcmp.lt.s32.totalorder %v141, 3
    %vm163 = vcmp.lt.s32.totalorder %v141, 4
    %v164 = vsel %vm160, %v144, %v147
    %v165 = vsel %vm163, %v153, 2102212464
    %v166 = vsel %vm162, %v150, %v165
    %v167 = vsel %vm161, %v164, %v166
    %v168 = vsel %vm160, %v147, %v150
    %v169 = vsel %vm163, %v156, 920167782
    %v170 = vsel %vm162, %v153, %v169
    %v171 = vsel %vm161, %v168, %v170
    %v172 = vsel %vm160, %v150, %v153
    %v173 = vsel %vm163, %v159, 1326507024
    %v174 = vsel %vm162, %v156, %v173
    %v175 = vsel %vm161, %v172, %v174
    %v176 = vshll.u32 %v136, 8
    %v177 = vmul.u32.u64.compose %v176, %v175
    %v178 = vextract.low.u32 %v177
    %v179 = vextract.high.u32 %v177
    %v180 = vmul.u32.u64.compose %v176, %v171
    %v181 = vextract.low.u32 %v180
    %v182 = vextract.high.u32 %v180
    %v183 = vmul.u32 %v176, %v167
    %v184 = vadd.s32 %v179, %v181
    %vm185 = vc.u32 %v179, %v181
    %v186 = vadd.s32 %v182, 1
    %v187 = vsel %vm185, %v186, %v182
    %v188 = vadd.s32 %v183, %v187
    %v189 = vadd.s32 %v188, 536870912
    %v190 = vshrl.u32 %v189, 30
    %v191 = vshll.u32 %v190, 30
    %v192 = vsub.s32 %v188, %v191
    %vm193 = vcmp.lt.s32.totalorder %v192, 0
    %v194 = vsub.s32 0, %v192
    %v195 = vsel %vm193, %v194, %v192
    %v196 = vclz %v195
    %v197 = vsub.s32 %v196, 2
    %vm198 = vcmp.gt.s32.totalorder 0, %v197
    %v199 = vsel %vm198, 0, %v197
    %v200 = vsub.s32 32, %v199
    %v201 = vshll.u32 %v192, %v199
    %v202 = vshrl.u32 %v184, %v200
    %v203 = vor.u32 %v201, %v202
    %v204 = vsub.s32 4294967266, %v199
    %v205 = vadd.s32 %v204, 127
    %v206 = vshll.u32 %v205, 23
    %v207 = vor.u32 4788187, %v206
    %v208 = vand.u32 2147483647, %v207
    %v210 = vcvt.s32.f32 %v203
    %v211 = vmul.f32 %v210, %v208
    %v212 = vxor.u32 %v211, 2147483648
    %v213 = vsel %vm130, %v212, %v211
    %v214 = vsub.s32 4, %v190
    %v215 = vsel %vm130, %v214, %v190
    %v216 = vsel %vm129, %v24, %v213
    %v217 = vsel %vm129, 0, %v215
    %v218 = vcosq.f32.pop %v216
    %v219 = vsinq.f32.pop %v216
    %vm220 = vweird.f32 %v24
    %v221 = vand.u32 %v217, 3
    %vm222 = vcmp.lt.s32.totalorder %v221, 2
    %vm223 = vcmp.eq.s32.totalorder %v221, 0
    %v224 = vxor.u32 %v219, 2147483648
    %v225 = vsel %vm223, %v218, %v224
    %vm226 = vcmp.eq.s32.totalorder %v221, 2
    %v227 = vxor.u32 %v218, 2147483648
    %v228 = vsel %vm226, %v227, %v219
    %v229 = vsel %vm222, %v225, %v228
    %v230 = vsel %vm220, nan, %v229
    %v231 = vadd.f32 %v127, 1.0
    %v232 = vadd.f32 %v230, 1.0
    %v233 = vmul.f32 %v231, 0.5
    %v234 = vmul.f32 %v232, 0.5
    %235 = vst [vmem:[#allocation5] sm:$0xff] %v233
    %236 = vst [vmem:[#allocation5 + $0x8] sm:$0xff] %v234
    // Predicated region
    $region10: #{tpu_custom_call.1} parent=1 // pred_check
      _
    $region11: #{tpu_custom_call.1} parent=1 // pred_check_branch
      %238 = sbr.rel (0) target = $region13
    $region12: #{tpu_custom_call.1} parent=1 // pred_region
      %s240 = ssub.s32 256, 256
      %241 = vsyncadd [#allocation4], %s240
      %s243 = sshll.u32 [#allocation5], 4
      %s244 = int_to_ptr.vmem [resolvable:$true] %s243
      %246 = dma.vmem_to_hbm [thread:$0]  %s244, 256, %s1, [#allocation4]
    $region13: #{tpu_custom_call.1} parent=1 // pred_fallthru
      _
    // Predicated region
    $region14: #{tpu_custom_call.1} parent=1 // pred_check
      _
    $region15: #{tpu_custom_call.1} parent=1 // pred_check_branch
      %248 = sbr.rel (0) target = $region17
    $region16: #{tpu_custom_call.1} parent=1 // pred_region
      %249 = dma.done [#allocation4], 256
    $region17: #{tpu_custom_call.1} parent=1 // pred_fallthru
      _
    %250 = vsyncpa [#allocation3], 1
    %251 = vsyncpa [#allocation4], 1

</llo_original>
